<compile_context>
chip_gen: v6e
topology: v6e:2x2x1
jax: 0.10.0
libtpu: 0.0.40
codegen_flags: <defaults>
</compile_context>

<pallas_src>
import numpy as np
import jax
import jax.numpy as jnp
from jax import lax
from jax.experimental import pallas as pl
from jax.experimental.pallas import tpu as pltpu


def _shifted_dft_1d(n):
    """Ortho-normalized 1-D DFT matrix with rows permuted so the output is already
    fftshift-ed along that axis.  complex128 numpy array of shape (n, n)."""
    k_out = (np.arange(n) - n // 2) % n          # row r holds frequency (r - n//2) mod n
    m = np.arange(n)
    ang = -2.0 * np.pi * np.outer(k_out, m) / n
    return (np.cos(ang) + 1j * np.sin(ang)) / np.sqrt(n)


def fused_shifted_dft2_mat(h, w, dtype=jnp.float32):
    """(HW, 2*HW) matrix [Re(D^T) | Im(D^T)] such that for a real image x flattened
    row-major over (h, w): x_flat @ M == [real | imag] of
    fftshift_{h,w}(fft2(x, norm='ortho')) flattened.  Fused so the full complex DFT
    is one MXU matmul."""
    d2 = np.kron(_shifted_dft_1d(h), _shifted_dft_1d(w))   # maps x_flat -> y_flat
    dt = d2.T                                               # right-multiplication form
    return jnp.asarray(np.concatenate([dt.real, dt.imag], axis=1), dtype=dtype)


def _choose_block_batch(n, c, target_rows=256, min_steps=2):
    """Images per grid step: fill the MXU rows (~256) but keep >= 2 grid steps when
    N allows it (both v7x TensorCores busy); must divide N exactly."""
    nb = max(1, target_rows // (2 * c))
    if n >= min_steps:
        nb = min(nb, n // min_steps)
    nb = max(1, min(nb, n))
    while n % nb:
        nb -= 1
    return nb


def atfm_kernel(x_ref, rand_ref, dt_ref, wc_ref, bias_ref, stu_ref, tea_ref):
    HW = dt_ref.shape[0]          # spatial size (lane axis)
    Mh = wc_ref.shape[0]          # nb*C (student rows == teacher rows)

    # Fused shifted 2-D DFT of student+teacher for all nb images in this step:
    # one (2*nb*C, HW) @ (HW, 2*HW) MXU matmul, f32 operands / f32 accumulation.
    y = jnp.dot(x_ref[...], dt_ref[...], preferred_element_type=jnp.float32)

    # Teacher output: tea_abs * exp(i*angle(tea_fft)) == tea_fft exactly; store the
    # packed [Re | Im] slab immediately so its output DMA overlaps the rest.
    tea_ref[...] = y[Mh:, :]

    y_re = y[:, :HW]              # lane split at HW is tile aligned
    y_im = y[:, HW:]

    # Magnitudes for ALL rows (student + teacher) via one guarded rsqrt (EUP).
    sq = y_re * y_re + y_im * y_im
    nz = sq > 0.0
    inv = lax.rsqrt(jnp.where(nz, sq, 1.0))
    ab = sq * inv                 # |fft|, rows = [stu images ; tea images]

    # Unit phase of the student FFT only (torch.angle(0) == 0 -> cos=1, sin=0).
    # Row split at Mh is sublane aligned when nb*C is a multiple of 8.
    cos_a = jnp.where(nz[:Mh], y_re[:Mh] * inv[:Mh], 1.0)
    sin_a = jnp.where(nz[:Mh], y_im[:Mh] * inv[:Mh], 0.0)

    # Fusion 1x1 convs + sigmoid(sigma) blend as a single matmul: wc is the
    # block-diagonal-over-images [alpha*W1 | (1-alpha)*W2] built wrapper-side; bias is
    # pre-broadcast to a lane-dense (nb*C, HW) slab.
    fused = jnp.dot(wc_ref[...], ab, preferred_element_type=jnp.float32)
    fused = (fused + bias_ref[...]) * rand_ref[...]

    # fused_abs * exp(i*angle(stu_fft)) packed as [Re | Im].
    stu_ref[:, :HW] = fused * cos_a
    stu_ref[:, HW:] = fused * sin_a


@jax.jit
def atfm_forward(stu, tea, w1, b1, w2, b2, sigma, rand):
    N, C, H, W = stu.shape
    HW = H * W
    if HW > 1024:
        # TODO(synk): for large spatial maps switch to a separable (H,H)/(W,W) DFT,
        # HW-tiled; the fused (HW, 2*HW) matrix stops fitting VMEM (esp. v7x 64 MiB).
        raise NotImplementedError("fused (HW,HW) DFT design targets HW <= 1024")

    nb = _choose_block_batch(N, C)
    steps = N // nb
    Mh = nb * C                   # student (== teacher) rows per grid step
    M = 2 * Mh                    # DFT LHS rows per grid step

    # torch.fft.fftshift(dim=None) shifts N, C, H, W of the FFT output.  The FFT is
    # independent per (n, c), so the N/C shift == rolling the *inputs* by (N//2, C//2)
    # (exact for any parity); the H/W shift is folded into the DFT-matrix row order.
    # Prep (roll + per-step grouping + stu|tea concat) happens wrapper-side on tiny
    # tensors; XLA fuses it, and the kernel sees one lane-dense (steps, 2*nb*C, HW).
    def prep(x):
        x = jnp.roll(x, shift=(N // 2, C // 2), axis=(0, 1))
        return x.reshape(steps, Mh, HW)
    x_in = jnp.concatenate([prep(stu), prep(tea)], axis=1)        # (steps, 2*nb*C, HW)

    rand_g = rand.reshape(steps, Mh, HW)        # rand multiplies in the shifted frame

    # Fold sigmoid(sigma) blending into the 1x1-conv weights (parameter-sized math)
    # and make them block-diagonal over the nb images packed into one grid step:
    #   fused[b*C+d] = sum_c a[d]*W1[d,c]*s_abs[b*C+c] + (1-a[d])*W2[d,c]*t_abs[b*C+c] + bias[d]
    alpha = jax.nn.sigmoid(sigma)
    # TODO(synk): MessageHub.update_scalar('train/sigma', mean(alpha)) is host-side
    #             logging with no Pallas equivalent; omitted.
    eye = jnp.eye(nb, dtype=jnp.float32)
    wc = jnp.concatenate([jnp.kron(eye, alpha[:, None] * w1),
                          jnp.kron(eye, (1.0 - alpha)[:, None] * w2)], axis=1)
    bias = jnp.tile(alpha * b1 + (1.0 - alpha) * b2, nb)
    bias_b = jnp.broadcast_to(bias[:, None], (Mh, HW))            # lane-dense bias

    dt = fused_shifted_dft2_mat(H, W)                             # (HW, 2*HW) f32

    out_shape = (jax.ShapeDtypeStruct((steps, Mh, 2 * HW), jnp.float32),
                 jax.ShapeDtypeStruct((steps, Mh, 2 * HW), jnp.float32))

    stu_pack, tea_pack = pl.pallas_call(
        atfm_kernel,
        out_shape=out_shape,
        grid_spec=pltpu.PrefetchScalarGridSpec(
            num_scalar_prefetch=0,
            grid=(steps,),
            in_specs=[
                pl.BlockSpec((None, M, HW), lambda i: (i, 0, 0)),    # stu+tea features
                pl.BlockSpec((None, Mh, HW), lambda i: (i, 0, 0)),   # rand multiplier
                pl.BlockSpec((HW, 2 * HW), lambda i: (0, 0)),        # DFT [Re|Im] (resident)
                pl.BlockSpec((Mh, 2 * Mh), lambda i: (0, 0)),        # fused conv weights
                pl.BlockSpec((Mh, HW), lambda i: (0, 0)),            # lane-dense bias
            ],
            out_specs=(
                pl.BlockSpec((None, Mh, 2 * HW), lambda i: (i, 0, 0)),   # student [Re|Im]
                pl.BlockSpec((None, Mh, 2 * HW), lambda i: (i, 0, 0)),   # teacher [Re|Im]
            ),
        ),
        compiler_params=pltpu.CompilerParams(
            dimension_semantics=("parallel",)),    # >= 2 steps keep both v7x TCs busy
    )(x_in, rand_g, dt, wc, bias_b)

    def unpack(p):
        p = p.reshape(N, C, 2 * HW)
        return (p[..., :HW] + 1j * p[..., HW:]).reshape(N, C, H, W)
    return unpack(stu_pack), unpack(tea_pack)


def ref_forward_np(stu, tea, w1, b1, w2, b2, sigma, rand):
    """float64 numpy reference mirroring the PyTorch module semantics."""
    stu, tea, rand = (np.asarray(a, np.float64) for a in (stu, tea, rand))
    w1, b1, w2, b2, sigma = (np.asarray(a, np.float64) for a in (w1, b1, w2, b2, sigma))

    def fourier_feature(x):
        f = np.fft.fftshift(np.fft.fft2(x, axes=(2, 3), norm='ortho'))   # shift all dims
        return np.abs(f), np.angle(f)

    sa, sp = fourier_feature(stu)
    ta, tp = fourier_feature(tea)
    n1 = np.einsum('dc,nchw->ndhw', w1, sa) + b1[None, :, None, None]
    n2 = np.einsum('dc,nchw->ndhw', w2, ta) + b2[None, :, None, None]
    alpha = (1.0 / (1.0 + np.exp(-sigma)))[None, :, None, None]
    fused = (alpha * n1 + (1.0 - alpha) * n2) * rand
    return fused * np.exp(1j * sp), ta * np.exp(1j * tp)


if __name__ == "__main__":
    N, C, H, W = 4, 8, 16, 16
    key = jax.random.PRNGKey(0)
    ks = jax.random.split(key, 7)
    bound = 1.0 / np.sqrt(C)

    # Deterministic synthetic parameters (Conv2d 1x1 weights/biases, sigma=0 as in __init__).
    w1 = jax.random.uniform(ks[0], (C, C), jnp.float32, -bound, bound)
    b1 = jax.random.uniform(ks[1], (C,), jnp.float32, -bound, bound)
    w2 = jax.random.uniform(ks[2], (C, C), jnp.float32, -bound, bound)
    b2 = jax.random.uniform(ks[3], (C,), jnp.float32, -bound, bound)
    sigma = jnp.zeros((C,), jnp.float32)

    stu = jax.random.normal(ks[4], (N, C, H, W), jnp.float32)
    tea = jax.random.normal(ks[5], (N, C, H, W), jnp.float32)
    rand = jax.random.uniform(ks[6], (N, C, H, W), jnp.float32)   # stand-in for torch.rand

    stu_c, tea_c = atfm_forward(stu, tea, w1, b1, w2, b2, sigma, rand)
    jax.block_until_ready((stu_c, tea_c))

    ref_stu, ref_tea = ref_forward_np(stu, tea, w1, b1, w2, b2, sigma, rand)
    stu_k, tea_k = np.asarray(stu_c), np.asarray(tea_c)

    # Teacher output (== the teacher FFT) and the student magnitude are well conditioned.
    np.testing.assert_allclose(tea_k, ref_tea, rtol=1e-4, atol=1e-4)
    np.testing.assert_allclose(np.abs(stu_k), np.abs(ref_stu), rtol=1e-4, atol=1e-4)

    # Full complex student output: the phase of a near-zero student-FFT bin is
    # intrinsically ill-conditioned (sensitivity ~ |fused|/|fft_bin|).  With the
    # all-f32 DFT the absolute FFT error is ~1e-6, so allow a small conditioned term
    # on top of rtol/atol = 1e-4.
    fft_ref = np.fft.fftshift(
        np.fft.fft2(np.asarray(stu, np.float64), axes=(2, 3), norm='ortho'))
    cond = np.abs(ref_stu) / np.maximum(np.abs(fft_ref), 1e-9)
    tol = 1e-4 + 1e-4 * np.abs(ref_stu) + 3e-5 * cond
    err = np.abs(stu_k - ref_stu)
    assert np.all(err <= tol), (
        f"student output mismatch (max excess {float((err - tol).max())})")

    print("KERNEL_OK")
</pallas_src>

<mosaic_0001>
module attributes {stable_mosaic.version = 11 : i64} {
  func.func @atfm_kernel(%arg0: i32, %arg1: memref<1x32x256xf32, #tpu.memory_space<vmem>>, %arg2: memref<1x16x256xf32, #tpu.memory_space<vmem>>, %arg3: memref<256x512xf32, #tpu.memory_space<vmem>>, %arg4: memref<16x32xf32, #tpu.memory_space<vmem>>, %arg5: memref<16x256xf32, #tpu.memory_space<vmem>>, %arg6: memref<1x16x512xf32, #tpu.memory_space<vmem>>, %arg7: memref<1x16x512xf32, #tpu.memory_space<vmem>>) attributes {dimension_semantics = [#tpu.dimension_semantics<parallel>], iteration_bounds = array<i64: 2>, scalar_prefetch = 0 : i64, scratch_operands = 0 : i64, tpu.core_type = #tpu.core_type<tc>, window_params = [{transform_indices = @transform_0, window_bounds = array<i64: 1, 32, 256>}, {transform_indices = @transform_1, window_bounds = array<i64: 1, 16, 256>}, {pipeline_mode = #tpu.pipeline_mode<synchronous>, transform_indices = @transform_2, window_bounds = array<i64: 256, 512>}, {pipeline_mode = #tpu.pipeline_mode<synchronous>, transform_indices = @transform_3, window_bounds = array<i64: 16, 32>}, {pipeline_mode = #tpu.pipeline_mode<synchronous>, transform_indices = @transform_4, window_bounds = array<i64: 16, 256>}, {transform_indices = @transform_5, window_bounds = array<i64: 1, 16, 512>}, {transform_indices = @transform_6, window_bounds = array<i64: 1, 16, 512>}]} {
    %c0 = arith.constant 0 : index
    %c0_0 = arith.constant 0 : index
    %c0_1 = arith.constant 0 : index
    %0 = vector.load %arg1[%c0, %c0_0, %c0_1] : memref<1x32x256xf32, #tpu.memory_space<vmem>>, vector<1x32x256xf32>
    %1 = vector.shape_cast %0 : vector<1x32x256xf32> to vector<32x256xf32>
    %c0_2 = arith.constant 0 : index
    %c0_3 = arith.constant 0 : index
    %2 = vector.load %arg3[%c0_2, %c0_3] : memref<256x512xf32, #tpu.memory_space<vmem>>, vector<256x512xf32>
    %cst = arith.constant dense<0.000000e+00> : vector<32x512xf32>
    %3 = tpu.matmul %1, %2, %cst {dimension_numbers = #tpu.dot_dimension_numbers<[1], [0], [0], [1], [0, 0, 1, 1], [], []>} : vector<32x256xf32>, vector<256x512xf32>, vector<32x512xf32> -> vector<32x512xf32>
    %4 = vector.extract_strided_slice %3 {offsets = [16, 0], sizes = [16, 512], strides = [1, 1]} : vector<32x512xf32> to vector<16x512xf32>
    %c0_4 = arith.constant 0 : index
    %c0_5 = arith.constant 0 : index
    %c0_6 = arith.constant 0 : index
    %5 = vector.load %arg7[%c0_4, %c0_5, %c0_6] : memref<1x16x512xf32, #tpu.memory_space<vmem>>, vector<1x16x512xf32>
    %6 = vector.shape_cast %5 : vector<1x16x512xf32> to vector<16x512xf32>
    %7 = vector.shape_cast %4 : vector<16x512xf32> to vector<1x16x512xf32>
    tpu.vector_store %arg7[%c0_4, %c0_5, %c0_6], %7 {strides = array<i32>} : memref<1x16x512xf32, #tpu.memory_space<vmem>>, vector<1x16x512xf32>,
    %8 = vector.extract_strided_slice %3 {offsets = [0, 0], sizes = [32, 256], strides = [1, 1]} : vector<32x512xf32> to vector<32x256xf32>
    %9 = vector.extract_strided_slice %3 {offsets = [0, 256], sizes = [32, 256], strides = [1, 1]} : vector<32x512xf32> to vector<32x256xf32>
    %10 = arith.mulf %8, %8 : vector<32x256xf32>
    %11 = arith.mulf %9, %9 : vector<32x256xf32>
    %12 = arith.addf %10, %11 : vector<32x256xf32>
    %cst_7 = arith.constant 0.000000e+00 : f32
    %13 = vector.broadcast %cst_7 : f32 to vector<32x256xf32>
    %14 = arith.cmpf ogt, %12, %13 : vector<32x256xf32>
    %cst_8 = arith.constant 1.000000e+00 : f32
    %15 = vector.broadcast %cst_8 : f32 to vector<32x256xf32>
    %16 = arith.select %14, %12, %15 : vector<32x256xi1>, vector<32x256xf32>
    %17 = math.rsqrt %16 : vector<32x256xf32>
    %18 = arith.mulf %12, %17 : vector<32x256xf32>
    %19 = vector.extract_strided_slice %14 {offsets = [0, 0], sizes = [16, 256], strides = [1, 1]} : vector<32x256xi1> to vector<16x256xi1>
    %20 = vector.extract_strided_slice %8 {offsets = [0, 0], sizes = [16, 256], strides = [1, 1]} : vector<32x256xf32> to vector<16x256xf32>
    %21 = vector.extract_strided_slice %17 {offsets = [0, 0], sizes = [16, 256], strides = [1, 1]} : vector<32x256xf32> to vector<16x256xf32>
    %22 = arith.mulf %20, %21 : vector<16x256xf32>
    %cst_9 = arith.constant 1.000000e+00 : f32
    %23 = vector.broadcast %cst_9 : f32 to vector<16x256xf32>
    %24 = arith.select %19, %22, %23 : vector<16x256xi1>, vector<16x256xf32>
    %25 = vector.extract_strided_slice %14 {offsets = [0, 0], sizes = [16, 256], strides = [1, 1]} : vector<32x256xi1> to vector<16x256xi1>
    %26 = vector.extract_strided_slice %9 {offsets = [0, 0], sizes = [16, 256], strides = [1, 1]} : vector<32x256xf32> to vector<16x256xf32>
    %27 = vector.extract_strided_slice %17 {offsets = [0, 0], sizes = [16, 256], strides = [1, 1]} : vector<32x256xf32> to vector<16x256xf32>
    %28 = arith.mulf %26, %27 : vector<16x256xf32>
    %cst_10 = arith.constant 0.000000e+00 : f32
    %29 = vector.broadcast %cst_10 : f32 to vector<16x256xf32>
    %30 = arith.select %25, %28, %29 : vector<16x256xi1>, vector<16x256xf32>
    %c0_11 = arith.constant 0 : index
    %c0_12 = arith.constant 0 : index
    %31 = vector.load %arg4[%c0_11, %c0_12] : memref<16x32xf32, #tpu.memory_space<vmem>>, vector<16x32xf32>
    %cst_13 = arith.constant dense<0.000000e+00> : vector<16x256xf32>
    %32 = tpu.matmul %31, %18, %cst_13 {dimension_numbers = #tpu.dot_dimension_numbers<[1], [0], [0], [1], [0, 0, 1, 1], [], []>} : vector<16x32xf32>, vector<32x256xf32>, vector<16x256xf32> -> vector<16x256xf32>
    %c0_14 = arith.constant 0 : index
    %c0_15 = arith.constant 0 : index
    %33 = vector.load %arg5[%c0_14, %c0_15] : memref<16x256xf32, #tpu.memory_space<vmem>>, vector<16x256xf32>
    %34 = arith.addf %32, %33 : vector<16x256xf32>
    %c0_16 = arith.constant 0 : index
    %c0_17 = arith.constant 0 : index
    %c0_18 = arith.constant 0 : index
    %35 = vector.load %arg2[%c0_16, %c0_17, %c0_18] : memref<1x16x256xf32, #tpu.memory_space<vmem>>, vector<1x16x256xf32>
    %36 = vector.shape_cast %35 : vector<1x16x256xf32> to vector<16x256xf32>
    %37 = arith.mulf %34, %36 : vector<16x256xf32>
    %38 = arith.mulf %37, %24 : vector<16x256xf32>
    %c0_19 = arith.constant 0 : index
    %c0_20 = arith.constant 0 : index
    %c0_21 = arith.constant 0 : index
    %39 = vector.load %arg6[%c0_19, %c0_20, %c0_21] : memref<1x16x512xf32, #tpu.memory_space<vmem>>, vector<1x16x256xf32>
    %40 = vector.shape_cast %39 : vector<1x16x256xf32> to vector<16x256xf32>
    %41 = vector.shape_cast %38 : vector<16x256xf32> to vector<1x16x256xf32>
    tpu.vector_store %arg6[%c0_19, %c0_20, %c0_21], %41 {strides = array<i32>} : memref<1x16x512xf32, #tpu.memory_space<vmem>>, vector<1x16x256xf32>,
    %42 = arith.mulf %37, %30 : vector<16x256xf32>
    %c0_22 = arith.constant 0 : index
    %c0_23 = arith.constant 0 : index
    %c256 = arith.constant 256 : index
    %43 = vector.load %arg6[%c0_22, %c0_23, %c256] : memref<1x16x512xf32, #tpu.memory_space<vmem>>, vector<1x16x256xf32>
    %44 = vector.shape_cast %43 : vector<1x16x256xf32> to vector<16x256xf32>
    %45 = vector.shape_cast %42 : vector<16x256xf32> to vector<1x16x256xf32>
    tpu.vector_store %arg6[%c0_22, %c0_23, %c256], %45 {strides = array<i32>} : memref<1x16x512xf32, #tpu.memory_space<vmem>>, vector<1x16x256xf32>,
    return
  }
  func.func @transform_0(%arg0: i32) -> (i32, i32, i32) {
    %c0_i32 = arith.constant 0 : i32
    %c0_i32_0 = arith.constant 0 : i32
    %c0_i32_1 = arith.constant 0 : i32
    return %arg0, %c0_i32, %c0_i32_0 : i32, i32, i32
  }
  func.func @transform_1(%arg0: i32) -> (i32, i32, i32) {
    %c0_i32 = arith.constant 0 : i32
    %c0_i32_0 = arith.constant 0 : i32
    %c0_i32_1 = arith.constant 0 : i32
    return %arg0, %c0_i32, %c0_i32_0 : i32, i32, i32
  }
  func.func @transform_2(%arg0: i32) -> (i32, i32) {
    %c0_i32 = arith.constant 0 : i32
    %c0_i32_0 = arith.constant 0 : i32
    %c0_i32_1 = arith.constant 0 : i32
    return %c0_i32, %c0_i32_0 : i32, i32
  }
  func.func @transform_3(%arg0: i32) -> (i32, i32) {
    %c0_i32 = arith.constant 0 : i32
    %c0_i32_0 = arith.constant 0 : i32
    %c0_i32_1 = arith.constant 0 : i32
    return %c0_i32, %c0_i32_0 : i32, i32
  }
  func.func @transform_4(%arg0: i32) -> (i32, i32) {
    %c0_i32 = arith.constant 0 : i32
    %c0_i32_0 = arith.constant 0 : i32
    %c0_i32_1 = arith.constant 0 : i32
    return %c0_i32, %c0_i32_0 : i32, i32
  }
  func.func @transform_5(%arg0: i32) -> (i32, i32, i32) {
    %c0_i32 = arith.constant 0 : i32
    %c0_i32_0 = arith.constant 0 : i32
    %c0_i32_1 = arith.constant 0 : i32
    return %arg0, %c0_i32, %c0_i32_0 : i32, i32, i32
  }
  func.func @transform_6(%arg0: i32) -> (i32, i32, i32) {
    %c0_i32 = arith.constant 0 : i32
    %c0_i32_0 = arith.constant 0 : i32
    %c0_i32_1 = arith.constant 0 : i32
    return %arg0, %c0_i32, %c0_i32_0 : i32, i32, i32
  }
}

</mosaic_0001>

<llo_original>
// kernel: tile.8
$region0: #{tile.8}
  #allocation0 [shape = 's32[1]{0}', space=sflag, size = 0x4, scoped, tag = 'scoped memory for tile.8']
  %s0 = inlined_call_operand.vmem [shape: f32[8], index: 0, kind: input, shape index: {}]
  %s1 = inlined_call_operand.vmem [shape: f32[2,8], index: 1, kind: output, shape index: {}]
  // Predicated region
  $region2: #{tile.8} parent=0 // pred_check
    _
  $region3: #{tile.8} parent=0 // pred_check_branch
    %3 = sbr.rel (0) target = $region5
  $region4: #{tile.8} parent=0 // pred_region
    _
  $region5: #{tile.8} parent=0 // pred_fallthru
    _
  %v4 = vld [vmem:[%s0] ss:$0 sm:$0xff]
  %5 = vst [vmem:[%s1] sm:$0x3] %v4

// kernel: custom-call
$region0: #{custom-call}
  %s0 = inlined_call_operand.vmem [shape: f32[4,8,16,16], index: 0, kind: input, shape index: {}]
  %s1 = inlined_call_operand.vmem [shape: f32[4,8,16,16], index: 1, kind: input, shape index: {}]
  %s2 = inlined_call_operand.hbm [shape: c64[4,8,16,16], index: 2, kind: output, shape index: {}]
  %s3 = scalar_lea.hbm %s2, 8192
  $region1: #{custom-call} parent=0
    #allocation0 [shape = 's32[1]{0}', space=sflag, size = 0x4, scoped, tag = 'scoped memory for custom-call']
    %4 = vsyncpa [#allocation0], 0
    %s5 = sshll.u32 %s0, 4
    %s6 = int_to_ptr.vmem [resolvable:$true] %s5
    %8 = dma.vmem_to_hbm [thread:$0]  %s6, 8192, %s2, [#allocation0]
    %9 = dma.done [#allocation0], 8192
    %10 = vsyncpa [#allocation0], 1
  $region2: #{custom-call} parent=0
    #allocation1 [shape = 's32[1]{0}', space=sflag, size = 0x4, scoped, tag = 'scoped memory for custom-call']
    %11 = vsyncpa [#allocation1], 0
    %s12 = sshll.u32 %s1, 4
    %s13 = int_to_ptr.vmem [resolvable:$true] %s12
    %15 = dma.vmem_to_hbm [thread:$0]  %s13, 8192, %s3, [#allocation1]
    %16 = dma.done [#allocation1], 8192
    %17 = vsyncpa [#allocation1], 1

// kernel: atfm_forward.1
$region0: #{atfm_forward.1}
  #allocation0 [shape = 'u32[]', space=smem, size = 0x4, offset = 0x4, fixed_abs, tag = 'smem constant byte address 0x4 - core index']
  #allocation1 [shape = 'u32[144,128]{1,0:T(1,128)}', space=vmem, size = 0x12000, scoped, tag = 'internal scratch']
  %s0 = inlined_call_operand.vmem [shape: f32[2,32,256], index: 0, kind: input, shape index: {}]
  %s1 = inlined_call_operand.vmem [shape: f32[2,16,256], index: 1, kind: input, shape index: {}]
  %s2 = inlined_call_operand.vmem [shape: f32[256,512], index: 2, kind: input, shape index: {}]
  %s3 = inlined_call_operand.vmem [shape: f32[16,32], index: 3, kind: input, shape index: {}]
  %s4 = inlined_call_operand.vmem [shape: f32[16,256], index: 4, kind: input, shape index: {}]
  %s5 = inlined_call_operand.vmem [shape: f32[2,16,512], index: 5, kind: output, shape index: {0}]
  %s6 = inlined_call_operand.vmem [shape: f32[2,16,512], index: 6, kind: output, shape index: {1}]
  %7 = xla_tuple %s5, %s6
  %s8 = sld [smem:[#allocation0]]
  $region61: #{atfm_forward.1} parent=0
    _
  %s10 = ssub.s32 1, %s8
  %s11 = scalar_select 0, %s10, %s8
  loop: start=0, step=1, limit=4
  $region2: #{atfm_forward.1} parent=0 // loop_pre_header
    _
  $region3: #{atfm_forward.1} parent=0 // loop_header
    %s13 = sphi 0, %s17
    %p14 = scmp.ge.s32.totalorder %s13, 4
    %s23 = sphi 0, %s25
    %s26 = sphi 0, %s23
    %s27 = sphi 0, %s26
    %s43 = sphi 0, %s27
    %s49 = sphi 0, %s51
    %s52 = sphi 0, %s49
    %s53 = sphi 0, %s52
    %s69 = sphi 0, %s53
    %s73 = sphi 0, %s73
    %s75 = sphi 0, %s73
    %s76 = sphi 0, %s75
    %s90 = sphi 0, %s76
    %s94 = sphi 0, %s94
    %s96 = sphi 0, %s94
    %s97 = sphi 0, %s96
    %s111 = sphi 0, %s97
    %s115 = sphi 0, %s115
    %s117 = sphi 0, %s115
    %s118 = sphi 0, %s117
    %s132 = sphi 0, %s118
    %s138 = sphi 0, %s140
    %s141 = sphi 0, %s138
    %s142 = sphi 0, %s141
    %s158 = sphi 0, %s142
    %s164 = sphi 0, %s166
    %s167 = sphi 0, %s164
    %s168 = sphi 0, %s167
    %s184 = sphi 0, %s168
  $region4: #{atfm_forward.1} parent=0 // loop_header_branch
    %16 = sbr.rel (%p14) target = $region8
  $region5: #{atfm_forward.1} parent=0 // loop_body
    %s18 = ssub.s32 %s13, 1
    %s19 = ssub.s32 %s13, 2
    %s20 = sadd.s32 %s13, 1
    %s21 = ssub.s32 %s13, %s20
    %p22 = scmp.eq.s32.totalorder %s21, 0
    %s24 = sadd.s32 %s23, 1
    %s25 = scalar_select %p22, %s23, %s24
    %p28 = pneg %p22
    %p29 = scmp.eq.s32.totalorder %s13, 1
    %p30 = por %p28, %p29
    %p31 = scmp.ne.s32.totalorder %s23, %s26
    %p32 = scmp.eq.s32.totalorder %s13, 0
    %p33 = por %p31, %p32
    %p34 = scmp.ne.s32.totalorder %s23, %s26
    %p35 = scmp.eq.s32.totalorder %s18, 1
    %p36 = por %p34, %p35
    %p37 = scmp.ne.s32.totalorder %s26, %s27
    %p38 = scmp.eq.s32.totalorder %s18, 0
    %p39 = por %p37, %p38
    %p40 = scmp.ne.s32.totalorder %s26, %s27
    %p41 = scmp.eq.s32.totalorder %s19, 1
    %p42 = por %p40, %p41
    %p44 = scmp.ne.s32.totalorder %s27, %s43
    %p45 = scmp.eq.s32.totalorder %s19, 0
    %p46 = por %p44, %p45
    %s47 = ssub.s32 %s13, %s20
    %p48 = scmp.eq.s32.totalorder %s47, 0
    %s50 = sadd.s32 %s49, 1
    %s51 = scalar_select %p48, %s49, %s50
    %p54 = pneg %p48
    %p55 = scmp.eq.s32.totalorder %s13, 1
    %p56 = por %p54, %p55
    %p57 = scmp.ne.s32.totalorder %s49, %s52
    %p58 = scmp.eq.s32.totalorder %s13, 0
    %p59 = por %p57, %p58
    %p60 = scmp.ne.s32.totalorder %s49, %s52
    %p61 = scmp.eq.s32.totalorder %s18, 1
    %p62 = por %p60, %p61
    %p63 = scmp.ne.s32.totalorder %s52, %s53
    %p64 = scmp.eq.s32.totalorder %s18, 0
    %p65 = por %p63, %p64
    %p66 = scmp.ne.s32.totalorder %s52, %s53
    %p67 = scmp.eq.s32.totalorder %s19, 1
    %p68 = por %p66, %p67
    %p70 = scmp.ne.s32.totalorder %s53, %s69
    %p71 = scmp.eq.s32.totalorder %s19, 0
    %p72 = por %p70, %p71
    %s74 = sadd.s32 %s73, 1
    %p77 = scmp.eq.s32.totalorder %s13, 1
    %p78 = scmp.ne.s32.totalorder %s73, %s75
    %p79 = scmp.eq.s32.totalorder %s13, 0
    %p80 = por %p78, %p79
    %p81 = scmp.ne.s32.totalorder %s73, %s75
    %p82 = scmp.eq.s32.totalorder %s18, 1
    %p83 = por %p81, %p82
    %p84 = scmp.ne.s32.totalorder %s75, %s76
    %p85 = scmp.eq.s32.totalorder %s18, 0
    %p86 = por %p84, %p85
    %p87 = scmp.ne.s32.totalorder %s75, %s76
    %p88 = scmp.eq.s32.totalorder %s19, 1
    %p89 = por %p87, %p88
    %p91 = scmp.ne.s32.totalorder %s76, %s90
    %p92 = scmp.eq.s32.totalorder %s19, 0
    %p93 = por %p91, %p92
    %s95 = sadd.s32 %s94, 1
    %p98 = scmp.eq.s32.totalorder %s13, 1
    %p99 = scmp.ne.s32.totalorder %s94, %s96
    %p100 = scmp.eq.s32.totalorder %s13, 0
    %p101 = por %p99, %p100
    %p102 = scmp.ne.s32.totalorder %s94, %s96
    %p103 = scmp.eq.s32.totalorder %s18, 1
    %p104 = por %p102, %p103
    %p105 = scmp.ne.s32.totalorder %s96, %s97
    %p106 = scmp.eq.s32.totalorder %s18, 0
    %p107 = por %p105, %p106
    %p108 = scmp.ne.s32.totalorder %s96, %s97
    %p109 = scmp.eq.s32.totalorder %s19, 1
    %p110 = por %p108, %p109
    %p112 = scmp.ne.s32.totalorder %s97, %s111
    %p113 = scmp.eq.s32.totalorder %s19, 0
    %p114 = por %p112, %p113
    %s116 = sadd.s32 %s115, 1
    %p119 = scmp.eq.s32.totalorder %s13, 1
    %p120 = scmp.ne.s32.totalorder %s115, %s117
    %p121 = scmp.eq.s32.totalorder %s13, 0
    %p122 = por %p120, %p121
    %p123 = scmp.ne.s32.totalorder %s115, %s117
    %p124 = scmp.eq.s32.totalorder %s18, 1
    %p125 = por %p123, %p124
    %p126 = scmp.ne.s32.totalorder %s117, %s118
    %p127 = scmp.eq.s32.totalorder %s18, 0
    %p128 = por %p126, %p127
    %p129 = scmp.ne.s32.totalorder %s117, %s118
    %p130 = scmp.eq.s32.totalorder %s19, 1
    %p131 = por %p129, %p130
    %p133 = scmp.ne.s32.totalorder %s118, %s132
    %p134 = scmp.eq.s32.totalorder %s19, 0
    %p135 = por %p133, %p134
    %s136 = ssub.s32 %s13, %s20
    %p137 = scmp.eq.s32.totalorder %s136, 0
    %s139 = sadd.s32 %s138, 1
    %s140 = scalar_select %p137, %s138, %s139
    %p143 = pneg %p137
    %p144 = scmp.eq.s32.totalorder %s13, 1
    %p145 = por %p143, %p144
    %p146 = scmp.ne.s32.totalorder %s138, %s141
    %p147 = scmp.eq.s32.totalorder %s13, 0
    %p148 = por %p146, %p147
    %p149 = scmp.ne.s32.totalorder %s138, %s141
    %p150 = scmp.eq.s32.totalorder %s18, 1
    %p151 = por %p149, %p150
    %p152 = scmp.ne.s32.totalorder %s141, %s142
    %p153 = scmp.eq.s32.totalorder %s18, 0
    %p154 = por %p152, %p153
    %p155 = scmp.ne.s32.totalorder %s141, %s142
    %p156 = scmp.eq.s32.totalorder %s19, 1
    %p157 = por %p155, %p156
    %p159 = scmp.ne.s32.totalorder %s142, %s158
    %p160 = scmp.eq.s32.totalorder %s19, 0
    %p161 = por %p159, %p160
    %s162 = ssub.s32 %s13, %s20
    %p163 = scmp.eq.s32.totalorder %s162, 0
    %s165 = sadd.s32 %s164, 1
    %s166 = scalar_select %p163, %s164, %s165
    %p169 = pneg %p163
    %p170 = scmp.eq.s32.totalorder %s13, 1
    %p171 = por %p169, %p170
    %p172 = scmp.ne.s32.totalorder %s164, %s167
    %p173 = scmp.eq.s32.totalorder %s13, 0
    %p174 = por %p172, %p173
    %p175 = scmp.ne.s32.totalorder %s164, %s167
    %p176 = scmp.eq.s32.totalorder %s18, 1
    %p177 = por %p175, %p176
    %p178 = scmp.ne.s32.totalorder %s167, %s168
    %p179 = scmp.eq.s32.totalorder %s18, 0
    %p180 = por %p178, %p179
    %p181 = scmp.ne.s32.totalorder %s167, %s168
    %p182 = scmp.eq.s32.totalorder %s19, 1
    %p183 = por %p181, %p182
    %p185 = scmp.ne.s32.totalorder %s168, %s184
    %p186 = scmp.eq.s32.totalorder %s19, 0
    %p187 = por %p185, %p186
    %p188 = scmp.le.s32.totalorder 1, %s13
    %p189 = scmp.lt.s32.totalorder %s13, 3
    %p190 = pnand %p188, %p189
    %p191 = pneg %p190
    // Predicated region
    $region9: #{atfm_forward.1} parent=5 // pred_check
      _
    $region10: #{atfm_forward.1} parent=5 // pred_check_branch
      %193 = sbr.rel (%p190) target = $region12
    $region11: #{atfm_forward.1} parent=5 // pred_region
      %s194 = ssub.s32 %s13, 1
      // Predicated region
      $region13: #{atfm_forward.1} parent=11 // pred_check
        %p195 = pneg %p86
      $region14: #{atfm_forward.1} parent=11 // pred_check_branch
        %197 = sbr.rel (%p195) target = $region16
      $region15: #{atfm_forward.1} parent=11 // pred_region
        _
      $region16: #{atfm_forward.1} parent=11 // pred_fallthru
        _
      // Predicated region
      $region17: #{atfm_forward.1} parent=11 // pred_check
        %p198 = pneg %p107
      $region18: #{atfm_forward.1} parent=11 // pred_check_branch
        %200 = sbr.rel (%p198) target = $region20
      $region19: #{atfm_forward.1} parent=11 // pred_region
        _
      $region20: #{atfm_forward.1} parent=11 // pred_fallthru
        _
      // Predicated region
      $region21: #{atfm_forward.1} parent=11 // pred_check
        %p201 = pneg %p128
      $region22: #{atfm_forward.1} parent=11 // pred_check_branch
        %203 = sbr.rel (%p201) target = $region24
      $region23: #{atfm_forward.1} parent=11 // pred_region
        _
      $region24: #{atfm_forward.1} parent=11 // pred_fallthru
        _
    $region12: #{atfm_forward.1} parent=5 // pred_fallthru
      _
    %p204 = scmp.lt.s32.totalorder %s13, 2
    // Predicated region
    $region25: #{atfm_forward.1} parent=5 // pred_check
      %p205 = pneg %p204
    $region26: #{atfm_forward.1} parent=5 // pred_check_branch
      %207 = sbr.rel (%p205) target = $region28
    $region27: #{atfm_forward.1} parent=5 // pred_region
      // Predicated region
      $region29: #{atfm_forward.1} parent=27 // pred_check
        %p208 = pneg %p33
      $region30: #{atfm_forward.1} parent=27 // pred_check_branch
        %210 = sbr.rel (%p208) target = $region32
      $region31: #{atfm_forward.1} parent=27 // pred_region
        %p211 = scmp.lt.s32.totalorder %s13, 1
        %s212 = scalar_select %p211, %s13, 1
        %s213 = smul.addr %s212, 8
        %s214 = smul.addr %s213, 8
        %s215 = scalar_lea.vmem %s0, %s214
      $region32: #{atfm_forward.1} parent=27 // pred_fallthru
        _
      // Predicated region
      $region33: #{atfm_forward.1} parent=27 // pred_check
        %p216 = pneg %p59
      $region34: #{atfm_forward.1} parent=27 // pred_check_branch
        %218 = sbr.rel (%p216) target = $region36
      $region35: #{atfm_forward.1} parent=27 // pred_region
        %p219 = scmp.lt.s32.totalorder %s13, 1
        %s220 = scalar_select %p219, %s13, 1
        %s221 = smul.addr %s220, 4
        %s222 = smul.addr %s221, 8
        %s223 = scalar_lea.vmem %s1, %s222
      $region36: #{atfm_forward.1} parent=27 // pred_fallthru
        _
    $region28: #{atfm_forward.1} parent=5 // pred_fallthru
      _
    %p224 = scmp.le.s32.totalorder 1, %s13
    %p225 = scmp.lt.s32.totalorder %s13, 3
    %p226 = pnand %p224, %p225
    %p227 = pneg %p226
    // Predicated region
    $region37: #{atfm_forward.1} parent=5 // pred_check
      _
    $region38: #{atfm_forward.1} parent=5 // pred_check_branch
      %229 = sbr.rel (%p226) target = $region40
    $region39: #{atfm_forward.1} parent=5 // pred_region
      %s230 = ssub.s32 %s13, 1
      %p231 = scmp.lt.s32.totalorder %s18, 1
      %s232 = scalar_select %p231, %s18, 1
      %s233 = smul.addr %s232, 8
      %s234 = smul.addr %s233, 8
      %s235 = scalar_lea.vmem %s0, %s234
      %p236 = pneg %p39
      %p237 = pneg %p36
      %p238 = scmp.lt.s32.totalorder %s18, 1
      %s239 = scalar_select %p238, %s18, 1
      %s240 = smul.addr %s239, 4
      %s241 = smul.addr %s240, 8
      %s242 = scalar_lea.vmem %s1, %s241
      %p243 = pneg %p65
      %p244 = pneg %p62
      %p245 = pneg %p86
      %p246 = pneg %p83
      %p247 = pneg %p107
      %p248 = pneg %p104
      %p249 = pneg %p128
      %p250 = pneg %p125
      %p251 = pneg %p154
      %p252 = pneg %p151
      %p253 = scmp.lt.s32.totalorder %s18, 1
      %s254 = scalar_select %p253, %s18, 1
      %s255 = smul.addr %s254, 8
      %s256 = smul.addr %s255, 8
      %s257 = scalar_lea.vmem %s5, %s256
      %p258 = pneg %p180
      %p259 = pneg %p177
      %p260 = scmp.lt.s32.totalorder %s18, 1
      %s261 = scalar_select %p260, %s18, 1
      %s262 = smul.addr %s261, 8
      %s263 = smul.addr %s262, 8
      %s264 = scalar_lea.vmem %s6, %s263
      %p265 = scmp.lt.s32.totalorder %s18, 1
      %s266 = scalar_select %p265, %s18, 1
      %s267 = smul.addr %s266, 8
      %s268 = smul.addr %s267, 8
      %s269 = scalar_lea.vmem %s0, %s268
      %p270 = scmp.lt.s32.totalorder %s18, 1
      %s271 = scalar_select %p270, %s18, 1
      %s272 = smul.addr %s271, 4
      %s273 = smul.addr %s272, 8
      %s274 = scalar_lea.vmem %s1, %s273
      %p275 = scmp.lt.s32.totalorder %s18, 1
      %s276 = scalar_select %p275, %s18, 1
      %s277 = smul.addr %s276, 8
      %s278 = smul.addr %s277, 8
      %s279 = scalar_lea.vmem %s5, %s278
      %p280 = scmp.lt.s32.totalorder %s18, 1
      %s281 = scalar_select %p280, %s18, 1
      %s282 = smul.addr %s281, 8
      %s283 = smul.addr %s282, 8
      %s284 = scalar_lea.vmem %s6, %s283
      %v285 = vld [vmem:[%s269] sm:$0xff]
      %v286 = vld [vmem:[%s269 + $0x8] sm:$0xff]
      %v287 = vld [vmem:[%s269 + $0x10] sm:$0xff]
      %v288 = vld [vmem:[%s269 + $0x18] sm:$0xff]
      %v289 = vld [vmem:[%s269 + $0x20] sm:$0xff]
      %v290 = vld [vmem:[%s269 + $0x28] sm:$0xff]
      %v291 = vld [vmem:[%s269 + $0x30] sm:$0xff]
      %v292 = vld [vmem:[%s269 + $0x38] sm:$0xff]
      %v293 = vld [vmem:[%s2] sm:$0xff]
      %v294 = vld [vmem:[%s2 + $0x8] sm:$0xff]
      %v295 = vld [vmem:[%s2 + $0x10] sm:$0xff]
      %v296 = vld [vmem:[%s2 + $0x18] sm:$0xff]
      %v297 = vld [vmem:[%s2 + $0x20] sm:$0xff]
      %v298 = vld [vmem:[%s2 + $0x28] sm:$0xff]
      %v299 = vld [vmem:[%s2 + $0x30] sm:$0xff]
      %v300 = vld [vmem:[%s2 + $0x38] sm:$0xff]
      %v301 = vld [vmem:[%s2 + $0x40] sm:$0xff]
      %v302 = vld [vmem:[%s2 + $0x48] sm:$0xff]
      %v303 = vld [vmem:[%s2 + $0x50] sm:$0xff]
      %v304 = vld [vmem:[%s2 + $0x58] sm:$0xff]
      %v305 = vld [vmem:[%s2 + $0x60] sm:$0xff]
      %v306 = vld [vmem:[%s2 + $0x68] sm:$0xff]
      %v307 = vld [vmem:[%s2 + $0x70] sm:$0xff]
      %v308 = vld [vmem:[%s2 + $0x78] sm:$0xff]
      %v309 = vld [vmem:[%s2 + $0x80] sm:$0xff]
      %v310 = vld [vmem:[%s2 + $0x88] sm:$0xff]
      %v311 = vld [vmem:[%s2 + $0x90] sm:$0xff]
      %v312 = vld [vmem:[%s2 + $0x98] sm:$0xff]
      %v313 = vld [vmem:[%s2 + $0xa0] sm:$0xff]
      %v314 = vld [vmem:[%s2 + $0xa8] sm:$0xff]
      %v315 = vld [vmem:[%s2 + $0xb0] sm:$0xff]
      %v316 = vld [vmem:[%s2 + $0xb8] sm:$0xff]
      %v317 = vld [vmem:[%s2 + $0xc0] sm:$0xff]
      %v318 = vld [vmem:[%s2 + $0xc8] sm:$0xff]
      %v319 = vld [vmem:[%s2 + $0xd0] sm:$0xff]
      %v320 = vld [vmem:[%s2 + $0xd8] sm:$0xff]
      %v321 = vld [vmem:[%s2 + $0xe0] sm:$0xff]
      %v322 = vld [vmem:[%s2 + $0xe8] sm:$0xff]
      %v323 = vld [vmem:[%s2 + $0xf0] sm:$0xff]
      %v324 = vld [vmem:[%s2 + $0xf8] sm:$0xff]
      %v325 = vld [vmem:[%s2 + $0x100] sm:$0xff]
      %v326 = vld [vmem:[%s2 + $0x108] sm:$0xff]
      %v327 = vld [vmem:[%s2 + $0x110] sm:$0xff]
      %v328 = vld [vmem:[%s2 + $0x118] sm:$0xff]
      %v329 = vld [vmem:[%s2 + $0x120] sm:$0xff]
      %v330 = vld [vmem:[%s2 + $0x128] sm:$0xff]
      %v331 = vld [vmem:[%s2 + $0x130] sm:$0xff]
      %v332 = vld [vmem:[%s2 + $0x138] sm:$0xff]
      %v333 = vld [vmem:[%s2 + $0x140] sm:$0xff]
      %v334 = vld [vmem:[%s2 + $0x148] sm:$0xff]
      %v335 = vld [vmem:[%s2 + $0x150] sm:$0xff]
      %v336 = vld [vmem:[%s2 + $0x158] sm:$0xff]
      %v337 = vld [vmem:[%s2 + $0x160] sm:$0xff]
      %v338 = vld [vmem:[%s2 + $0x168] sm:$0xff]
      %v339 = vld [vmem:[%s2 + $0x170] sm:$0xff]
      %v340 = vld [vmem:[%s2 + $0x178] sm:$0xff]
      %v341 = vld [vmem:[%s2 + $0x180] sm:$0xff]
      %v342 = vld [vmem:[%s2 + $0x188] sm:$0xff]
      %v343 = vld [vmem:[%s2 + $0x190] sm:$0xff]
      %v344 = vld [vmem:[%s2 + $0x198] sm:$0xff]
      %v345 = vld [vmem:[%s2 + $0x1a0] sm:$0xff]
      %v346 = vld [vmem:[%s2 + $0x1a8] sm:$0xff]
      %v347 = vld [vmem:[%s2 + $0x1b0] sm:$0xff]
      %v348 = vld [vmem:[%s2 + $0x1b8] sm:$0xff]
      %v349 = vld [vmem:[%s2 + $0x1c0] sm:$0xff]
      %v350 = vld [vmem:[%s2 + $0x1c8] sm:$0xff]
      %v351 = vld [vmem:[%s2 + $0x1d0] sm:$0xff]
      %v352 = vld [vmem:[%s2 + $0x1d8] sm:$0xff]
      %v353 = vld [vmem:[%s2 + $0x1e0] sm:$0xff]
      %v354 = vld [vmem:[%s2 + $0x1e8] sm:$0xff]
      %v355 = vld [vmem:[%s2 + $0x1f0] sm:$0xff]
      %v356 = vld [vmem:[%s2 + $0x1f8] sm:$0xff]
      %v357 = vld [vmem:[%s2 + $0x200] sm:$0xff]
      %v358 = vld [vmem:[%s2 + $0x208] sm:$0xff]
      %v359 = vld [vmem:[%s2 + $0x210] sm:$0xff]
      %v360 = vld [vmem:[%s2 + $0x218] sm:$0xff]
      %v361 = vld [vmem:[%s2 + $0x220] sm:$0xff]
      %v362 = vld [vmem:[%s2 + $0x228] sm:$0xff]
      %v363 = vld [vmem:[%s2 + $0x230] sm:$0xff]
      %v364 = vld [vmem:[%s2 + $0x238] sm:$0xff]
      %v365 = vld [vmem:[%s2 + $0x240] sm:$0xff]
      %v366 = vld [vmem:[%s2 + $0x248] sm:$0xff]
      %v367 = vld [vmem:[%s2 + $0x250] sm:$0xff]
      %v368 = vld [vmem:[%s2 + $0x258] sm:$0xff]
      %v369 = vld [vmem:[%s2 + $0x260] sm:$0xff]
      %v370 = vld [vmem:[%s2 + $0x268] sm:$0xff]
      %v371 = vld [vmem:[%s2 + $0x270] sm:$0xff]
      %v372 = vld [vmem:[%s2 + $0x278] sm:$0xff]
      %v373 = vld [vmem:[%s2 + $0x280] sm:$0xff]
      %v374 = vld [vmem:[%s2 + $0x288] sm:$0xff]
      %v375 = vld [vmem:[%s2 + $0x290] sm:$0xff]
      %v376 = vld [vmem:[%s2 + $0x298] sm:$0xff]
      %v377 = vld [vmem:[%s2 + $0x2a0] sm:$0xff]
      %v378 = vld [vmem:[%s2 + $0x2a8] sm:$0xff]
      %v379 = vld [vmem:[%s2 + $0x2b0] sm:$0xff]
      %v380 = vld [vmem:[%s2 + $0x2b8] sm:$0xff]
      %v381 = vld [vmem:[%s2 + $0x2c0] sm:$0xff]
      %v382 = vld [vmem:[%s2 + $0x2c8] sm:$0xff]
      %v383 = vld [vmem:[%s2 + $0x2d0] sm:$0xff]
      %v384 = vld [vmem:[%s2 + $0x2d8] sm:$0xff]
      %v385 = vld [vmem:[%s2 + $0x2e0] sm:$0xff]
      %v386 = vld [vmem:[%s2 + $0x2e8] sm:$0xff]
      %v387 = vld [vmem:[%s2 + $0x2f0] sm:$0xff]
      %v388 = vld [vmem:[%s2 + $0x2f8] sm:$0xff]
      %v389 = vld [vmem:[%s2 + $0x300] sm:$0xff]
      %v390 = vld [vmem:[%s2 + $0x308] sm:$0xff]
      %v391 = vld [vmem:[%s2 + $0x310] sm:$0xff]
      %v392 = vld [vmem:[%s2 + $0x318] sm:$0xff]
      %v393 = vld [vmem:[%s2 + $0x320] sm:$0xff]
      %v394 = vld [vmem:[%s2 + $0x328] sm:$0xff]
      %v395 = vld [vmem:[%s2 + $0x330] sm:$0xff]
      %v396 = vld [vmem:[%s2 + $0x338] sm:$0xff]
      %v397 = vld [vmem:[%s2 + $0x340] sm:$0xff]
      %v398 = vld [vmem:[%s2 + $0x348] sm:$0xff]
      %v399 = vld [vmem:[%s2 + $0x350] sm:$0xff]
      %v400 = vld [vmem:[%s2 + $0x358] sm:$0xff]
      %v401 = vld [vmem:[%s2 + $0x360] sm:$0xff]
      %v402 = vld [vmem:[%s2 + $0x368] sm:$0xff]
      %v403 = vld [vmem:[%s2 + $0x370] sm:$0xff]
      %v404 = vld [vmem:[%s2 + $0x378] sm:$0xff]
      %v405 = vld [vmem:[%s2 + $0x380] sm:$0xff]
      %v406 = vld [vmem:[%s2 + $0x388] sm:$0xff]
      %v407 = vld [vmem:[%s2 + $0x390] sm:$0xff]
      %v408 = vld [vmem:[%s2 + $0x398] sm:$0xff]
      %v409 = vld [vmem:[%s2 + $0x3a0] sm:$0xff]
      %v410 = vld [vmem:[%s2 + $0x3a8] sm:$0xff]
      %v411 = vld [vmem:[%s2 + $0x3b0] sm:$0xff]
      %v412 = vld [vmem:[%s2 + $0x3b8] sm:$0xff]
      %v413 = vld [vmem:[%s2 + $0x3c0] sm:$0xff]
      %v414 = vld [vmem:[%s2 + $0x3c8] sm:$0xff]
      %v415 = vld [vmem:[%s2 + $0x3d0] sm:$0xff]
      %v416 = vld [vmem:[%s2 + $0x3d8] sm:$0xff]
      %v417 = vld [vmem:[%s2 + $0x3e0] sm:$0xff]
      %v418 = vld [vmem:[%s2 + $0x3e8] sm:$0xff]
      %v419 = vld [vmem:[%s2 + $0x3f0] sm:$0xff]
      %v420 = vld [vmem:[%s2 + $0x3f8] sm:$0xff]
      %421 = vmatprep.subr.mxu0 %v354
      %422 = vmatpush1.msra.mxu0 %v353
      %423 = vmatprep.subr.mxu0 %v350
      %424 = vmatpush1.msra.mxu0 %v349
      %425 = vmatprep.subr.mxu0 %v346
      %426 = vmatpush1.msra.mxu0 %v345
      %427 = vmatprep.subr.mxu0 %v342
      %428 = vmatpush1.msra.mxu0 %v341
      %429 = vmatprep.subr.mxu0 %v338
      %430 = vmatpush1.msra.mxu0 %v337
      %431 = vmatprep.subr.mxu0 %v334
      %432 = vmatpush1.msra.mxu0 %v333
      %433 = vmatprep.subr.mxu0 %v330
      %434 = vmatpush1.msra.mxu0 %v329
      %435 = vmatprep.subr.mxu0 %v326
      %436 = vmatpush1.msra.mxu0 %v325
      %437 = vmatprep.subr.mxu0 %v322
      %438 = vmatpush1.msra.mxu0 %v321
      %439 = vmatprep.subr.mxu0 %v318
      %440 = vmatpush1.msra.mxu0 %v317
      %441 = vmatprep.subr.mxu0 %v314
      %442 = vmatpush1.msra.mxu0 %v313
      %443 = vmatprep.subr.mxu0 %v310
      %444 = vmatpush1.msra.mxu0 %v309
      %445 = vmatprep.subr.mxu0 %v306
      %446 = vmatpush1.msra.mxu0 %v305
      %447 = vmatprep.subr.mxu0 %v302
      %448 = vmatpush1.msra.mxu0 %v301
      %449 = vmatprep.subr.mxu0 %v298
      %450 = vmatpush1.msra.mxu0 %v297
      %451 = vmatprep.subr.mxu0 %v294
      %452 = vmatpush1.msra.mxu0 %v293
      %453 = vmatprep.subr.mxu0 %v418
      %454 = vmatpush2.msra.mxu0 %v417
      %455 = vmatprep.subr.mxu0 %v414
      %456 = vmatpush2.msra.mxu0 %v413
      %457 = vmatprep.subr.mxu0 %v410
      %458 = vmatpush2.msra.mxu0 %v409
      %459 = vmatprep.subr.mxu0 %v406
      %460 = vmatpush2.msra.mxu0 %v405
      %461 = vmatprep.subr.mxu0 %v402
      %462 = vmatpush2.msra.mxu0 %v401
      %463 = vmatprep.subr.mxu0 %v398
      %464 = vmatpush2.msra.mxu0 %v397
      %465 = vmatprep.subr.mxu0 %v394
      %466 = vmatpush2.msra.mxu0 %v393
      %467 = vmatprep.subr.mxu0 %v390
      %468 = vmatpush2.msra.mxu0 %v389
      %469 = vmatprep.subr.mxu0 %v386
      %470 = vmatpush2.msra.mxu0 %v385
      %471 = vmatprep.subr.mxu0 %v382
      %472 = vmatpush2.msra.mxu0 %v381
      %473 = vmatprep.subr.mxu0 %v378
      %474 = vmatpush2.msra.mxu0 %v377
      %475 = vmatprep.subr.mxu0 %v374
      %476 = vmatpush2.msra.mxu0 %v373
      %477 = vmatprep.subr.mxu0 %v370
      %478 = vmatpush2.msra.mxu0 %v369
      %479 = vmatprep.subr.mxu0 %v366
      %480 = vmatpush2.msra.mxu0 %v365
      %481 = vmatprep.subr.mxu0 %v362
      %482 = vmatpush2.msra.mxu0 %v361
      %483 = vmatprep.subr.mxu0 %v358
      %484 = vmatpush2.msra.mxu0 %v357
      %485 = vmatprep.mubr.f32.mxu0 %v286
      %486 = vmatmul.mubr.f32.gmra.mxu0 %v285
      %v487 = vpop.f32.mrf.mxu0
      %v488 = vadd.f32 0.0, %v487
      %v489 = vpop.f32.mrf.mxu0
      %v490 = vadd.f32 0.0, %v489
      %491 = vmatprep.mubr.f32.mxu0 %v288
      %492 = vmatmul.mubr.f32.gmra.mxu0 %v287
      %v493 = vpop.f32.mrf.mxu0
      %v494 = vadd.f32 0.0, %v493
      %v495 = vpop.f32.mrf.mxu0
      %v496 = vadd.f32 0.0, %v495
      %497 = vmatprep.mubr.f32.mxu0 %v290
      %498 = vmatmul.mubr.f32.gmra.mxu0 %v289
      %v499 = vpop.f32.mrf.mxu0
      %v500 = vadd.f32 0.0, %v499
      %v501 = vpop.f32.mrf.mxu0
      %v502 = vadd.f32 0.0, %v501
      %503 = vmatprep.mubr.f32.mxu0 %v292
      %504 = vmatmul.mubr.f32.gmra.mxu0 %v291
      %v505 = vpop.f32.mrf.mxu0
      %v506 = vadd.f32 0.0, %v505
      %v507 = vpop.f32.mrf.mxu0
      %v508 = vadd.f32 0.0, %v507
      %509 = vdwg.mxu0
      %510 = vmatprep.subr.mxu0 %v356
      %511 = vmatpush1.msra.mxu0 %v355
      %512 = vmatprep.subr.mxu0 %v352
      %513 = vmatpush1.msra.mxu0 %v351
      %514 = vmatprep.subr.mxu0 %v348
      %515 = vmatpush1.msra.mxu0 %v347
      %516 = vmatprep.subr.mxu0 %v344
      %517 = vmatpush1.msra.mxu0 %v343
      %518 = vmatprep.subr.mxu0 %v340
      %519 = vmatpush1.msra.mxu0 %v339
      %520 = vmatprep.subr.mxu0 %v336
      %521 = vmatpush1.msra.mxu0 %v335
      %522 = vmatprep.subr.mxu0 %v332
      %523 = vmatpush1.msra.mxu0 %v331
      %524 = vmatprep.subr.mxu0 %v328
      %525 = vmatpush1.msra.mxu0 %v327
      %526 = vmatprep.subr.mxu0 %v324
      %527 = vmatpush1.msra.mxu0 %v323
      %528 = vmatprep.subr.mxu0 %v320
      %529 = vmatpush1.msra.mxu0 %v319
      %530 = vmatprep.subr.mxu0 %v316
      %531 = vmatpush1.msra.mxu0 %v315
      %532 = vmatprep.subr.mxu0 %v312
      %533 = vmatpush1.msra.mxu0 %v311
      %534 = vmatprep.subr.mxu0 %v308
      %535 = vmatpush1.msra.mxu0 %v307
      %536 = vmatprep.subr.mxu0 %v304
      %537 = vmatpush1.msra.mxu0 %v303
      %538 = vmatprep.subr.mxu0 %v300
      %539 = vmatpush1.msra.mxu0 %v299
      %540 = vmatprep.subr.mxu0 %v296
      %541 = vmatpush1.msra.mxu0 %v295
      %542 = vmatprep.subr.mxu0 %v420
      %543 = vmatpush2.msra.mxu0 %v419
      %544 = vmatprep.subr.mxu0 %v416
      %545 = vmatpush2.msra.mxu0 %v415
      %546 = vmatprep.subr.mxu0 %v412
      %547 = vmatpush2.msra.mxu0 %v411
      %548 = vmatprep.subr.mxu0 %v408
      %549 = vmatpush2.msra.mxu0 %v407
      %550 = vmatprep.subr.mxu0 %v404
      %551 = vmatpush2.msra.mxu0 %v403
      %552 = vmatprep.subr.mxu0 %v400
      %553 = vmatpush2.msra.mxu0 %v399
      %554 = vmatprep.subr.mxu0 %v396
      %555 = vmatpush2.msra.mxu0 %v395
      %556 = vmatprep.subr.mxu0 %v392
      %557 = vmatpush2.msra.mxu0 %v391
      %558 = vmatprep.subr.mxu0 %v388
      %559 = vmatpush2.msra.mxu0 %v387
      %560 = vmatprep.subr.mxu0 %v384
      %561 = vmatpush2.msra.mxu0 %v383
      %562 = vmatprep.subr.mxu0 %v380
      %563 = vmatpush2.msra.mxu0 %v379
      %564 = vmatprep.subr.mxu0 %v376
      %565 = vmatpush2.msra.mxu0 %v375
      %566 = vmatprep.subr.mxu0 %v372
      %567 = vmatpush2.msra.mxu0 %v371
      %568 = vmatprep.subr.mxu0 %v368
      %569 = vmatpush2.msra.mxu0 %v367
      %570 = vmatprep.subr.mxu0 %v364
      %571 = vmatpush2.msra.mxu0 %v363
      %572 = vmatprep.subr.mxu0 %v360
      %573 = vmatpush2.msra.mxu0 %v359
      %574 = vmatprep.mubr.f32.mxu0 %v286
      %575 = vmatmul.mubr.f32.gmra.mxu0 %v285
      %v576 = vpop.f32.mrf.mxu0
      %v577 = vadd.f32 0.0, %v576
      %v578 = vpop.f32.mrf.mxu0
      %v579 = vadd.f32 0.0, %v578
      %580 = vmatprep.mubr.f32.mxu0 %v288
      %581 = vmatmul.mubr.f32.gmra.mxu0 %v287
      %v582 = vpop.f32.mrf.mxu0
      %v583 = vadd.f32 0.0, %v582
      %v584 = vpop.f32.mrf.mxu0
      %v585 = vadd.f32 0.0, %v584
      %586 = vmatprep.mubr.f32.mxu0 %v290
      %587 = vmatmul.mubr.f32.gmra.mxu0 %v289
      %v588 = vpop.f32.mrf.mxu0
      %v589 = vadd.f32 0.0, %v588
      %v590 = vpop.f32.mrf.mxu0
      %v591 = vadd.f32 0.0, %v590
      %592 = vmatprep.mubr.f32.mxu0 %v292
      %593 = vmatmul.mubr.f32.gmra.mxu0 %v291
      %v594 = vpop.f32.mrf.mxu0
      %v595 = vadd.f32 0.0, %v594
      %v596 = vpop.f32.mrf.mxu0
      %v597 = vadd.f32 0.0, %v596
      %598 = vdwg.mxu0
      %599 = vst [vmem:[%s284] sm:$0xff] %v500
      %600 = vst [vmem:[%s284 + $0x8] sm:$0xff] %v502
      %601 = vst [vmem:[%s284 + $0x10] sm:$0xff] %v589
      %602 = vst [vmem:[%s284 + $0x18] sm:$0xff] %v591
      %603 = vst [vmem:[%s284 + $0x20] sm:$0xff] %v506
      %604 = vst [vmem:[%s284 + $0x28] sm:$0xff] %v508
      %605 = vst [vmem:[%s284 + $0x30] sm:$0xff] %v595
      %606 = vst [vmem:[%s284 + $0x38] sm:$0xff] %v597
      %v607 = vmul.f32 %v488, %v488
      %v608 = vmul.f32 %v490, %v490
      %v609 = vmul.f32 %v494, %v494
      %v610 = vmul.f32 %v496, %v496
      %v611 = vmul.f32 %v500, %v500
      %v612 = vmul.f32 %v502, %v502
      %v613 = vmul.f32 %v506, %v506
      %v614 = vmul.f32 %v508, %v508
      %v615 = vmul.f32 %v577, %v577
      %v616 = vmul.f32 %v579, %v579
      %v617 = vmul.f32 %v583, %v583
      %v618 = vmul.f32 %v585, %v585
      %v619 = vmul.f32 %v589, %v589
      %v620 = vmul.f32 %v591, %v591
      %v621 = vmul.f32 %v595, %v595
      %v622 = vmul.f32 %v597, %v597
      %v623 = vadd.f32 %v607, %v615
      %v624 = vadd.f32 %v608, %v616
      %v625 = vadd.f32 %v609, %v617
      %v626 = vadd.f32 %v610, %v618
      %v627 = vadd.f32 %v611, %v619
      %v628 = vadd.f32 %v612, %v620
      %v629 = vadd.f32 %v613, %v621
      %v630 = vadd.f32 %v614, %v622
      %vm631 = vcmp.gt.f32.partialorder %v623, 0.0
      %vm632 = vcmp.gt.f32.partialorder %v624, 0.0
      %vm633 = vcmp.gt.f32.partialorder %v625, 0.0
      %vm634 = vcmp.gt.f32.partialorder %v626, 0.0
      %vm635 = vcmp.gt.f32.partialorder %v627, 0.0
      %vm636 = vcmp.gt.f32.partialorder %v628, 0.0
      %vm637 = vcmp.gt.f32.partialorder %v629, 0.0
      %vm638 = vcmp.gt.f32.partialorder %v630, 0.0
      %v639 = vsel %vm631, %v623, 1.0
      %v640 = vsel %vm632, %v624, 1.0
      %v641 = vsel %vm633, %v625, 1.0
      %v642 = vsel %vm634, %v626, 1.0
      %v643 = vsel %vm635, %v627, 1.0
      %v644 = vsel %vm636, %v628, 1.0
      %v645 = vsel %vm637, %v629, 1.0
      %v646 = vsel %vm638, %v630, 1.0
      %v647 = vrsqrt.pop %v639
      %v648 = vrsqrt.pop %v640
      %v649 = vrsqrt.pop %v641
      %v650 = vrsqrt.pop %v642
      %v651 = vrsqrt.pop %v643
      %v652 = vrsqrt.pop %v644
      %v653 = vrsqrt.pop %v645
      %v654 = vrsqrt.pop %v646
      %v655 = vmul.f32 %v623, %v647
      %v656 = vmul.f32 %v624, %v648
      %v657 = vmul.f32 %v625, %v649
      %v658 = vmul.f32 %v626, %v650
      %v659 = vmul.f32 %v627, %v651
      %v660 = vmul.f32 %v628, %v652
      %v661 = vmul.f32 %v629, %v653
      %v662 = vmul.f32 %v630, %v654
      %v663 = vmul.f32 %v488, %v647
      %v664 = vmul.f32 %v490, %v648
      %v665 = vmul.f32 %v494, %v649
      %v666 = vmul.f32 %v496, %v650
      %v667 = vsel %vm631, %v663, 1.0
      %v668 = vsel %vm632, %v664, 1.0
      %v669 = vsel %vm633, %v665, 1.0
      %v670 = vsel %vm634, %v666, 1.0
      %v671 = vmul.f32 %v577, %v647
      %v672 = vmul.f32 %v579, %v648
      %v673 = vmul.f32 %v583, %v649
      %v674 = vmul.f32 %v585, %v650
      %v675 = vsel %vm631, %v671, 0.0
      %v676 = vsel %vm632, %v672, 0.0
      %v677 = vsel %vm633, %v673, 0.0
      %v678 = vsel %vm634, %v674, 0.0
      %v679 = vld [vmem:[%s3] sm:$0xff]
      %v680 = vld [vmem:[%s3 + $0x8] sm:$0xff]
      %v681 = vld [vmem:[%s4] sm:$0xff]
      %v682 = vld [vmem:[%s4 + $0x8] sm:$0xff]
      %v683 = vld [vmem:[%s4 + $0x10] sm:$0xff]
      %v684 = vld [vmem:[%s4 + $0x18] sm:$0xff]
      %vm685 = vcmask 261120
      %v687 = vsel %vm685, %v679, 0
      %v690 = vsel %vm685, %v680, 0
      %692 = vmatprep.subr.mxu0 0.0
      %693 = vmatpush1.msra.mxu0 0.0
      %694 = vmatprep.subr.mxu0 0.0
      %695 = vmatpush1.msra.mxu0 0.0
      %696 = vmatprep.subr.mxu0 0.0
      %697 = vmatpush1.msra.mxu0 0.0
      %698 = vmatprep.subr.mxu0 0.0
      %699 = vmatpush1.msra.mxu0 0.0
      %700 = vmatprep.subr.mxu0 0.0
      %701 = vmatpush1.msra.mxu0 0.0
      %702 = vmatprep.subr.mxu0 0.0
      %703 = vmatpush1.msra.mxu0 0.0
      %704 = vmatprep.subr.mxu0 0.0
      %705 = vmatpush1.msra.mxu0 0.0
      %706 = vmatprep.subr.mxu0 0.0
      %707 = vmatpush1.msra.mxu0 0.0
      %708 = vmatprep.subr.mxu0 0.0
      %709 = vmatpush1.msra.mxu0 0.0
      %710 = vmatprep.subr.mxu0 0.0
      %711 = vmatpush1.msra.mxu0 0.0
      %712 = vmatprep.subr.mxu0 0.0
      %713 = vmatpush1.msra.mxu0 0.0
      %714 = vmatprep.subr.mxu0 0.0
      %715 = vmatpush1.msra.mxu0 0.0
      %716 = vmatprep.subr.mxu0 %v662
      %717 = vmatpush1.msra.mxu0 %v661
      %718 = vmatprep.subr.mxu0 %v660
      %719 = vmatpush1.msra.mxu0 %v659
      %720 = vmatprep.subr.mxu0 %v658
      %721 = vmatpush1.msra.mxu0 %v657
      %722 = vmatprep.subr.mxu0 %v656
      %723 = vmatpush1.msra.mxu0 %v655
      %724 = vmatprep.subr.mxu0 0.0
      %725 = vmatpush2.msra.mxu0 0.0
      %726 = vmatprep.subr.mxu0 0.0
      %727 = vmatpush2.msra.mxu0 0.0
      %728 = vmatprep.subr.mxu0 0.0
      %729 = vmatpush2.msra.mxu0 0.0
      %730 = vmatprep.subr.mxu0 0.0
      %731 = vmatpush2.msra.mxu0 0.0
      %732 = vmatprep.subr.mxu0 0.0
      %733 = vmatpush2.msra.mxu0 0.0
      %734 = vmatprep.subr.mxu0 0.0
      %735 = vmatpush2.msra.mxu0 0.0
      %736 = vmatprep.subr.mxu0 0.0
      %737 = vmatpush2.msra.mxu0 0.0
      %738 = vmatprep.subr.mxu0 0.0
      %739 = vmatpush2.msra.mxu0 0.0
      %740 = vmatprep.subr.mxu0 0.0
      %741 = vmatpush2.msra.mxu0 0.0
      %742 = vmatprep.subr.mxu0 0.0
      %743 = vmatpush2.msra.mxu0 0.0
      %744 = vmatprep.subr.mxu0 0.0
      %745 = vmatpush2.msra.mxu0 0.0
      %746 = vmatprep.subr.mxu0 0.0
      %747 = vmatpush2.msra.mxu0 0.0
      %748 = vmatprep.subr.mxu0 0.0
      %749 = vmatpush2.msra.mxu0 0.0
      %750 = vmatprep.subr.mxu0 0.0
      %751 = vmatpush2.msra.mxu0 0.0
      %752 = vmatprep.subr.mxu0 0.0
      %753 = vmatpush2.msra.mxu0 0.0
      %754 = vmatprep.subr.mxu0 0.0
      %755 = vmatpush2.msra.mxu0 0.0
      %756 = vmatprep.mubr.f32.mxu0 0.0
      %757 = vmatmul.mubr.f32.gmra.mxu0 %v687
      %v758 = vpop.f32.mrf.mxu0
      %v759 = vadd.f32 %v681, %v758
      %v760 = vpop.f32.mrf.mxu0
      %v761 = vadd.f32 %v682, %v760
      %762 = vmatprep.mubr.f32.mxu0 0.0
      %763 = vmatmul.mubr.f32.gmra.mxu0 %v690
      %v764 = vpop.f32.mrf.mxu0
      %v765 = vadd.f32 %v683, %v764
      %v766 = vpop.f32.mrf.mxu0
      %v767 = vadd.f32 %v684, %v766
      %768 = vdwg.mxu0
      %v769 = vld [vmem:[%s274] sm:$0xff]
      %v770 = vld [vmem:[%s274 + $0x8] sm:$0xff]
      %v771 = vld [vmem:[%s274 + $0x10] sm:$0xff]
      %v772 = vld [vmem:[%s274 + $0x18] sm:$0xff]
      %v773 = vmul.f32 %v759, %v769
      %v774 = vmul.f32 %v761, %v770
      %v775 = vmul.f32 %v765, %v771
      %v776 = vmul.f32 %v767, %v772
      %v777 = vmul.f32 %v773, %v667
      %v778 = vmul.f32 %v774, %v668
      %v779 = vmul.f32 %v775, %v669
      %v780 = vmul.f32 %v776, %v670
      %781 = vst [vmem:[%s279] sm:$0xff] %v777
      %782 = vst [vmem:[%s279 + $0x8] sm:$0xff] %v778
      %783 = vst [vmem:[%s279 + $0x20] sm:$0xff] %v779
      %784 = vst [vmem:[%s279 + $0x28] sm:$0xff] %v780
      %v785 = vmul.f32 %v773, %v675
      %v786 = vmul.f32 %v774, %v676
      %v787 = vmul.f32 %v775, %v677
      %v788 = vmul.f32 %v776, %v678
      %789 = vst [vmem:[%s279 + $0x10] sm:$0xff] %v785
      %790 = vst [vmem:[%s279 + $0x18] sm:$0xff] %v786
      %791 = vst [vmem:[%s279 + $0x30] sm:$0xff] %v787
      %792 = vst [vmem:[%s279 + $0x38] sm:$0xff] %v788
      %p793 = scmp.lt.s32.totalorder %s18, 1
      %s794 = scalar_select %p793, %s18, 1
      %s795 = smul.addr %s794, 8
      %s796 = smul.addr %s795, 8
      %s797 = scalar_lea.vmem %s5, %s796
      %p798 = scmp.lt.s32.totalorder %s18, 1
      %s799 = scalar_select %p798, %s18, 1
      %s800 = smul.addr %s799, 8
      %s801 = smul.addr %s800, 8
      %s802 = scalar_lea.vmem %s6, %s801
      // Predicated region
      $region41: #{atfm_forward.1} parent=39 // pred_check
        %p803 = pneg %p151
      $region42: #{atfm_forward.1} parent=39 // pred_check_branch
        %805 = sbr.rel (%p803) target = $region44
      $region43: #{atfm_forward.1} parent=39 // pred_region
        _
      $region44: #{atfm_forward.1} parent=39 // pred_fallthru
        _
      // Predicated region
      $region45: #{atfm_forward.1} parent=39 // pred_check
        %p806 = pneg %p177
      $region46: #{atfm_forward.1} parent=39 // pred_check_branch
        %808 = sbr.rel (%p806) target = $region48
      $region47: #{atfm_forward.1} parent=39 // pred_region
        _
      $region48: #{atfm_forward.1} parent=39 // pred_fallthru
        _
    $region40: #{atfm_forward.1} parent=5 // pred_fallthru
      _
    %p809 = scmp.le.s32.totalorder 2, %s13
    // Predicated region
    $region49: #{atfm_forward.1} parent=5 // pred_check
      %p810 = pneg %p809
    $region50: #{atfm_forward.1} parent=5 // pred_check_branch
      %812 = sbr.rel (%p810) target = $region52
    $region51: #{atfm_forward.1} parent=5 // pred_region
      %s813 = ssub.s32 %s13, 2
      // Predicated region
      $region53: #{atfm_forward.1} parent=51 // pred_check
        %p814 = pneg %p157
      $region54: #{atfm_forward.1} parent=51 // pred_check_branch
        %816 = sbr.rel (%p814) target = $region56
      $region55: #{atfm_forward.1} parent=51 // pred_region
        %p817 = scmp.lt.s32.totalorder %s19, 1
        %s818 = scalar_select %p817, %s19, 1
        %s819 = smul.addr %s818, 8
        %s820 = smul.addr %s819, 8
        %s821 = scalar_lea.vmem %s5, %s820
      $region56: #{atfm_forward.1} parent=51 // pred_fallthru
        _
      // Predicated region
      $region57: #{atfm_forward.1} parent=51 // pred_check
        %p822 = pneg %p183
      $region58: #{atfm_forward.1} parent=51 // pred_check_branch
        %824 = sbr.rel (%p822) target = $region60
      $region59: #{atfm_forward.1} parent=51 // pred_region
        %p825 = scmp.lt.s32.totalorder %s19, 1
        %s826 = scalar_select %p825, %s19, 1
        %s827 = smul.addr %s826, 8
        %s828 = smul.addr %s827, 8
        %s829 = scalar_lea.vmem %s6, %s828
      $region60: #{atfm_forward.1} parent=51 // pred_fallthru
        _
    $region52: #{atfm_forward.1} parent=5 // pred_fallthru
      _
  $region6: #{atfm_forward.1} parent=0 // loop_footer
    %s17 = sadd.s32 1, %s13
  $region7: #{atfm_forward.1} parent=0 // loop_footer_branch
    %12 = sbr.rel target = $region3
  $region8: #{atfm_forward.1} parent=0 // loop_exit
    _

</llo_original>
